<compile_context>
chip_gen: v7x
topology: tpu7x:2x2x1
jax: 0.10.0
libtpu: 0.0.40
codegen_flags: <defaults>
</compile_context>

<pallas_src>
import jax
import jax.numpy as jnp
from jax.experimental import pallas as pl
from jax.experimental.pallas import tpu as pltpu

C = 5              # organ_list = ['back', 'heart', 'eso', 'spine', 'lungs']
H, W = 256, 384    # the module hard-codes (256, 384) weight maps
TILE_H = 128       # rows per grid step -> grid of 2
CHUNK = 16         # rows per in-kernel chunk
GRID = H // TILE_H
NCHUNK = TILE_H // CHUNK
EPS = 1e-8


def _fpfn_gather(arg_p, wf):
    """Select-chain gather of w_fpfn[arg_p] for arg_p in 1..C-1.
    (arg_p == 0 is masked out by the caller, so its value here is irrelevant.)"""
    wfg = jnp.where(arg_p == 1, wf[1], wf[C - 1])
    for c in range(2, C - 1):
        wfg = jnp.where(arg_p == c, wf[c], wfg)
    return wfg


def _wce_onehot_kernel(w_gold_ref, w_fpfn_ref, pred_ref, gold_ref, out_ref):
    # pred_ref, gold_ref: (C, TILE_H, W) f32.   out_ref: (8, W) f32 partial sums.
    # Hoist all SMEM scalar reads out of the chunk loop (JAX does not CSE them).
    wg = [w_gold_ref[c] for c in range(C)]
    wf = [w_fpfn_ref[c] for c in range(C)]     # wf[0] unused (background excluded)

    out_ref[...] = jnp.zeros_like(out_ref)

    @pl.loop(0, NCHUNK)                        # rolled loop bounds live ranges
    def _(ci):
        r0 = pl.multiple_of(ci * CHUNK, CHUNK)

        p0 = pred_ref[0, pl.ds(r0, CHUNK), :]
        g0 = gold_ref[0, pl.ds(r0, CHUNK), :]
        best_p = p0
        arg_p = jnp.zeros(p0.shape, jnp.float32)   # running argmax over pred
        arg_g = jnp.zeros(p0.shape, jnp.float32)   # argmax over (one-hot) gold
        p_gold = g0 * p0                           # -> pred[gold]
        weight = g0 * wg[0]                        # -> w_gold[gold]

        for c in range(1, C):                      # static unroll over the 5 organs
            pc = pred_ref[c, pl.ds(r0, CHUNK), :]
            gc = gold_ref[c, pl.ds(r0, CHUNK), :]
            gt = pc > best_p                       # strict '>' == np.argmax tie-break
            arg_p = jnp.where(gt, float(c), arg_p)
            best_p = jnp.where(gt, pc, best_p)
            p_gold = p_gold + gc * pc
            weight = weight + gc * wg[c]
            arg_g = arg_g + float(c) * gc

        # FP/FN reweighting: wrong, non-background prediction -> w_fpfn[arg_p].
        wfg = _fpfn_gather(arg_p, wf)
        weight_all = jnp.where((arg_p != arg_g) & (arg_p != 0.0), wfg, weight)

        # -sum_c gold*log(pred+eps) == -log(pred[gold]+eps) for strict one-hot gold.
        wl = weight_all * (-jnp.log(p_gold + EPS))

        # fold the 16 chunk rows into the (8, W) output slab with plain VPU adds;
        # the single cross-lane reduce happens in the wrapper's jnp.sum.
        out_ref[...] += wl[0:8, :] + wl[8:16, :]


def _wce_label_kernel(w_gold_ref, w_fpfn_ref, pred_ref, lab_ref, out_ref, lab32_ref):
    # pred_ref: (C, TILE_H, W) f32.  lab_ref: (TILE_H, W) integer labels
    # (int8 preferred).  out_ref: (8, W) f32.  lab32_ref: (TILE_H, W) i32 scratch.
    wg = [w_gold_ref[c] for c in range(C)]
    wf = [w_fpfn_ref[c] for c in range(C)]

    # Widen (and clamp to the valid organ range) the label tile once per grid
    # step, in 32-row slices aligned to the int8 (32,128) sublane packing, so
    # the chunk loop below only reads plain int32.
    for r in range(0, TILE_H, 32):
        lab32_ref[pl.ds(r, 32), :] = jnp.clip(
            lab_ref[pl.ds(r, 32), :].astype(jnp.int32), 0, C - 1)

    out_ref[...] = jnp.zeros_like(out_ref)

    @pl.loop(0, NCHUNK)
    def _(ci):
        r0 = pl.multiple_of(ci * CHUNK, CHUNK)
        lab = lab32_ref[pl.ds(r0, CHUNK), :]

        p0 = pred_ref[0, pl.ds(r0, CHUNK), :]
        best_p = p0
        arg_p = jnp.zeros(lab.shape, jnp.int32)
        is0 = lab == 0
        p_gold = jnp.where(is0, p0, 0.0)
        weight = jnp.where(is0, wg[0], 0.0)

        for c in range(1, C):
            pc = pred_ref[c, pl.ds(r0, CHUNK), :]
            gt = pc > best_p
            arg_p = jnp.where(gt, c, arg_p)
            best_p = jnp.where(gt, pc, best_p)
            isc = lab == c
            p_gold = jnp.where(isc, pc, p_gold)
            weight = jnp.where(isc, wg[c], weight)

        wfg = _fpfn_gather(arg_p, wf)
        weight_all = jnp.where((arg_p != lab) & (arg_p != 0), wfg, weight)

        wl = weight_all * (-jnp.log(p_gold + EPS))
        out_ref[...] += wl[0:8, :] + wl[8:16, :]


def _partials_onehot(pred, gold, w_gold, w_fpfn):
    blk = pl.BlockSpec((None, C, TILE_H, W), lambda i, wg, wf: (0, 0, i, 0))
    return pl.pallas_call(
        _wce_onehot_kernel,
        out_shape=jax.ShapeDtypeStruct((GRID * 8, W), jnp.float32),
        grid_spec=pltpu.PrefetchScalarGridSpec(
            num_scalar_prefetch=2,
            grid=(GRID,),
            in_specs=[blk, blk],
            out_specs=pl.BlockSpec((8, W), lambda i, wg, wf: (i, 0)),
        ),
        compiler_params=pltpu.CompilerParams(
            # grid=(2,) parallel -> one TILE_H tile per TensorCore on v7x.
            dimension_semantics=("parallel",)),
    )(w_gold, w_fpfn, pred, gold)


def _partials_labels(pred, labels, w_gold, w_fpfn):
    return pl.pallas_call(
        _wce_label_kernel,
        out_shape=jax.ShapeDtypeStruct((GRID * 8, W), jnp.float32),
        grid_spec=pltpu.PrefetchScalarGridSpec(
            num_scalar_prefetch=2,
            grid=(GRID,),
            in_specs=[
                pl.BlockSpec((None, C, TILE_H, W), lambda i, wg, wf: (0, 0, i, 0)),
                pl.BlockSpec((TILE_H, W), lambda i, wg, wf: (i, 0)),
            ],
            out_specs=pl.BlockSpec((8, W), lambda i, wg, wf: (i, 0)),
            scratch_shapes=[pltpu.VMEM((TILE_H, W), jnp.int32)],
        ),
        compiler_params=pltpu.CompilerParams(
            dimension_semantics=("parallel",)),
    )(w_gold, w_fpfn, pred, labels)


@jax.jit
def weighted_cross_entropy_loss(pred, gold, size_weight, w_fpfn):
    """pred: (1, C, H, W) f32 predicted probabilities.
       gold: (1, C, H, W) strict one-hot  OR  (1, H, W) integer labels
             (int8 labels give the smallest kernel HBM stream).
       size_weight, w_fpfn: (C,) f32 per-organ weights; w_fpfn[c] > 0 for c >= 1.
       Returns the scalar weighted cross-entropy loss of the torch module."""
    pred = pred.astype(jnp.float32)
    w_gold = size_weight.astype(jnp.float32)
    w_fpfn = w_fpfn.astype(jnp.float32)
    if gold.ndim == 4:
        partials = _partials_onehot(pred, gold.astype(jnp.float32), w_gold, w_fpfn)
    else:
        partials = _partials_labels(pred, gold[0], w_gold, w_fpfn)
    return jnp.sum(partials) / jnp.float32(H * W)


def _reference(pred, gold, w_gold, w_fpfn):
    # Direct transcription of the torch module's math (one-hot gold path).
    p = pred[0]
    g = gold[0]
    arg_p = jnp.argmax(p, axis=0)
    arg_g = jnp.argmax(g, axis=0)
    fpfn = jnp.where(arg_p != arg_g, arg_p, 0)
    weight = w_gold[arg_g]
    weight_fpfn = jnp.where(fpfn > 0, w_fpfn[fpfn], 0.0)
    weight_all = jnp.where(weight_fpfn > 0.0, weight_fpfn, weight)
    loss = -jnp.sum(g * jnp.log(p + 1e-8), axis=0)
    return jnp.mean(weight_all * loss)


if __name__ == "__main__":
    key = jax.random.PRNGKey(0)
    k1, k2 = jax.random.split(key)

    logits = jax.random.normal(k1, (1, C, H, W), jnp.float32)
    pred = jax.nn.softmax(logits, axis=1)                        # net output (probs)
    labels = jax.random.randint(k2, (1, H, W), 0, C)
    gold = jax.nn.one_hot(labels, C, axis=1, dtype=jnp.float32)  # (1, C, H, W)

    # size_weight dict -> deterministic per-organ vector
    size_weight = jnp.array([1.0, 2.0, 3.0, 4.0, 5.0], jnp.float32)
    # TODO(synk): odiff in the original comes from on-disk projection JSONs and
    # hp.getProcPointsDict set-diffs (host-side file I/O, no Pallas equivalent);
    # use a deterministic per-organ odiff vector instead.
    odiff = jnp.array([0.0, 1.0, 2.0, 3.0, 4.0], jnp.float32)
    w_fpfn = (1.0 + 0.0005 * odiff) * size_weight
    w_fpfn = w_fpfn.at[0].set(0.0)   # background never contributes to FP/FN weight

    ref = _reference(pred, gold, size_weight, w_fpfn)

    # Path 1: one-hot gold (module's native input) -- fused argmax, no label pass.
    loss_oh = jax.block_until_ready(
        weighted_cross_entropy_loss(pred, gold, size_weight, w_fpfn))
    assert jnp.allclose(loss_oh, ref, rtol=1e-4, atol=1e-5), (loss_oh, ref)

    # Path 2: integer-label fast path with int8 labels (smallest HBM stream).
    loss_lab = jax.block_until_ready(
        weighted_cross_entropy_loss(pred, labels.astype(jnp.int8),
                                    size_weight, w_fpfn))
    assert jnp.allclose(loss_lab, ref, rtol=1e-4, atol=1e-5), (loss_lab, ref)

    print("KERNEL_OK")
</pallas_src>

<mosaic_0001>
module attributes {stable_mosaic.version = 11 : i64} {
  func.func @_wce_onehot_kernel(%arg0: i32, %arg1: memref<5xf32, #tpu.memory_space<smem>>, %arg2: memref<5xf32, #tpu.memory_space<smem>>, %arg3: memref<1x5x128x384xf32, #tpu.memory_space<vmem>>, %arg4: memref<1x5x128x384xf32, #tpu.memory_space<vmem>>, %arg5: memref<8x384xf32, #tpu.memory_space<vmem>>) attributes {dimension_semantics = [#tpu.dimension_semantics<parallel>], iteration_bounds = array<i64: 2>, scalar_prefetch = 2 : i64, scratch_operands = 0 : i64, tpu.core_type = #tpu.core_type<tc>, window_params = [{transform_indices = @transform_0, window_bounds = array<i64: 1, 5, 128, 384>}, {transform_indices = @transform_1, window_bounds = array<i64: 1, 5, 128, 384>}, {transform_indices = @transform_2, window_bounds = array<i64: 8, 384>}]} {
    %c0 = arith.constant 0 : index
    %0 = memref.load %arg1[%c0] : memref<5xf32, #tpu.memory_space<smem>>
    %c1 = arith.constant 1 : index
    %1 = memref.load %arg1[%c1] : memref<5xf32, #tpu.memory_space<smem>>
    %c2 = arith.constant 2 : index
    %2 = memref.load %arg1[%c2] : memref<5xf32, #tpu.memory_space<smem>>
    %c3 = arith.constant 3 : index
    %3 = memref.load %arg1[%c3] : memref<5xf32, #tpu.memory_space<smem>>
    %c4 = arith.constant 4 : index
    %4 = memref.load %arg1[%c4] : memref<5xf32, #tpu.memory_space<smem>>
    %c1_0 = arith.constant 1 : index
    %5 = memref.load %arg2[%c1_0] : memref<5xf32, #tpu.memory_space<smem>>
    %c2_1 = arith.constant 2 : index
    %6 = memref.load %arg2[%c2_1] : memref<5xf32, #tpu.memory_space<smem>>
    %c3_2 = arith.constant 3 : index
    %7 = memref.load %arg2[%c3_2] : memref<5xf32, #tpu.memory_space<smem>>
    %c4_3 = arith.constant 4 : index
    %8 = memref.load %arg2[%c4_3] : memref<5xf32, #tpu.memory_space<smem>>
    %cst = arith.constant 0.000000e+00 : f32
    %9 = vector.broadcast %cst : f32 to vector<8x384xf32>
    %c0_4 = arith.constant 0 : index
    %c0_5 = arith.constant 0 : index
    %10 = vector.load %arg5[%c0_4, %c0_5] : memref<8x384xf32, #tpu.memory_space<vmem>>, vector<8x384xf32>
    tpu.vector_store %arg5[%c0_4, %c0_5], %9 {strides = array<i32>} : memref<8x384xf32, #tpu.memory_space<vmem>>, vector<8x384xf32>,
    %c0_i32 = arith.constant 0 : i32
    %c8_i32 = arith.constant 8 : i32
    %11 = arith.addi %c0_i32, %c8_i32 : i32
    %c1_i32 = arith.constant 1 : i32
    scf.for %arg6 = %c0_i32 to %11 step %c1_i32  : i32 {
      %c1_i32_7 = arith.constant 1 : i32
      %12 = arith.muli %arg6, %c1_i32_7 : i32
      %c0_i32_8 = arith.constant 0 : i32
      %13 = arith.addi %c0_i32_8, %12 : i32
      %c16_i32 = arith.constant 16 : i32
      %14 = arith.muli %13, %c16_i32 : i32
      %15 = tpu.assume_multiple %14, 16 : i32
      %c0_9 = arith.constant 0 : index
      %c0_10 = arith.constant 0 : index
      %16 = arith.index_cast %15 : i32 to index
      %c0_11 = arith.constant 0 : index
      %17 = vector.load %arg3[%c0_9, %c0_10, %16, %c0_11] : memref<1x5x128x384xf32, #tpu.memory_space<vmem>>, vector<1x1x16x384xf32>
      %18 = vector.shape_cast %17 : vector<1x1x16x384xf32> to vector<16x384xf32>
      %c0_12 = arith.constant 0 : index
      %c0_13 = arith.constant 0 : index
      %19 = arith.index_cast %15 : i32 to index
      %c0_14 = arith.constant 0 : index
      %20 = vector.load %arg4[%c0_12, %c0_13, %19, %c0_14] : memref<1x5x128x384xf32, #tpu.memory_space<vmem>>, vector<1x1x16x384xf32>
      %21 = vector.shape_cast %20 : vector<1x1x16x384xf32> to vector<16x384xf32>
      %cst_15 = arith.constant 0.000000e+00 : f32
      %22 = vector.broadcast %cst_15 : f32 to vector<16x384xf32>
      %cst_16 = arith.constant 0.000000e+00 : f32
      %23 = vector.broadcast %cst_16 : f32 to vector<16x384xf32>
      %24 = arith.mulf %21, %18 : vector<16x384xf32>
      %25 = vector.broadcast %0 : f32 to vector<16x384xf32>
      %26 = arith.mulf %21, %25 : vector<16x384xf32>
      %c0_17 = arith.constant 0 : index
      %c1_18 = arith.constant 1 : index
      %27 = arith.index_cast %15 : i32 to index
      %c0_19 = arith.constant 0 : index
      %28 = vector.load %arg3[%c0_17, %c1_18, %27, %c0_19] : memref<1x5x128x384xf32, #tpu.memory_space<vmem>>, vector<1x1x16x384xf32>
      %29 = vector.shape_cast %28 : vector<1x1x16x384xf32> to vector<16x384xf32>
      %c0_20 = arith.constant 0 : index
      %c1_21 = arith.constant 1 : index
      %30 = arith.index_cast %15 : i32 to index
      %c0_22 = arith.constant 0 : index
      %31 = vector.load %arg4[%c0_20, %c1_21, %30, %c0_22] : memref<1x5x128x384xf32, #tpu.memory_space<vmem>>, vector<1x1x16x384xf32>
      %32 = vector.shape_cast %31 : vector<1x1x16x384xf32> to vector<16x384xf32>
      %33 = arith.cmpf ogt, %29, %18 : vector<16x384xf32>
      %cst_23 = arith.constant 1.000000e+00 : f32
      %34 = vector.broadcast %cst_23 : f32 to vector<16x384xf32>
      %35 = arith.select %33, %34, %22 : vector<16x384xi1>, vector<16x384xf32>
      %36 = arith.select %33, %29, %18 : vector<16x384xi1>, vector<16x384xf32>
      %37 = arith.mulf %32, %29 : vector<16x384xf32>
      %38 = arith.addf %24, %37 : vector<16x384xf32>
      %39 = vector.broadcast %1 : f32 to vector<16x384xf32>
      %40 = arith.mulf %32, %39 : vector<16x384xf32>
      %41 = arith.addf %26, %40 : vector<16x384xf32>
      %cst_24 = arith.constant 1.000000e+00 : f32
      %42 = vector.broadcast %cst_24 : f32 to vector<16x384xf32>
      %43 = arith.mulf %42, %32 : vector<16x384xf32>
      %44 = arith.addf %23, %43 : vector<16x384xf32>
      %c0_25 = arith.constant 0 : index
      %c2_26 = arith.constant 2 : index
      %45 = arith.index_cast %15 : i32 to index
      %c0_27 = arith.constant 0 : index
      %46 = vector.load %arg3[%c0_25, %c2_26, %45, %c0_27] : memref<1x5x128x384xf32, #tpu.memory_space<vmem>>, vector<1x1x16x384xf32>
      %47 = vector.shape_cast %46 : vector<1x1x16x384xf32> to vector<16x384xf32>
      %c0_28 = arith.constant 0 : index
      %c2_29 = arith.constant 2 : index
      %48 = arith.index_cast %15 : i32 to index
      %c0_30 = arith.constant 0 : index
      %49 = vector.load %arg4[%c0_28, %c2_29, %48, %c0_30] : memref<1x5x128x384xf32, #tpu.memory_space<vmem>>, vector<1x1x16x384xf32>
      %50 = vector.shape_cast %49 : vector<1x1x16x384xf32> to vector<16x384xf32>
      %51 = arith.cmpf ogt, %47, %36 : vector<16x384xf32>
      %cst_31 = arith.constant 2.000000e+00 : f32
      %52 = vector.broadcast %cst_31 : f32 to vector<16x384xf32>
      %53 = arith.select %51, %52, %35 : vector<16x384xi1>, vector<16x384xf32>
      %54 = arith.select %51, %47, %36 : vector<16x384xi1>, vector<16x384xf32>
      %55 = arith.mulf %50, %47 : vector<16x384xf32>
      %56 = arith.addf %38, %55 : vector<16x384xf32>
      %57 = vector.broadcast %2 : f32 to vector<16x384xf32>
      %58 = arith.mulf %50, %57 : vector<16x384xf32>
      %59 = arith.addf %41, %58 : vector<16x384xf32>
      %cst_32 = arith.constant 2.000000e+00 : f32
      %60 = vector.broadcast %cst_32 : f32 to vector<16x384xf32>
      %61 = arith.mulf %60, %50 : vector<16x384xf32>
      %62 = arith.addf %44, %61 : vector<16x384xf32>
      %c0_33 = arith.constant 0 : index
      %c3_34 = arith.constant 3 : index
      %63 = arith.index_cast %15 : i32 to index
      %c0_35 = arith.constant 0 : index
      %64 = vector.load %arg3[%c0_33, %c3_34, %63, %c0_35] : memref<1x5x128x384xf32, #tpu.memory_space<vmem>>, vector<1x1x16x384xf32>
      %65 = vector.shape_cast %64 : vector<1x1x16x384xf32> to vector<16x384xf32>
      %c0_36 = arith.constant 0 : index
      %c3_37 = arith.constant 3 : index
      %66 = arith.index_cast %15 : i32 to index
      %c0_38 = arith.constant 0 : index
      %67 = vector.load %arg4[%c0_36, %c3_37, %66, %c0_38] : memref<1x5x128x384xf32, #tpu.memory_space<vmem>>, vector<1x1x16x384xf32>
      %68 = vector.shape_cast %67 : vector<1x1x16x384xf32> to vector<16x384xf32>
      %69 = arith.cmpf ogt, %65, %54 : vector<16x384xf32>
      %cst_39 = arith.constant 3.000000e+00 : f32
      %70 = vector.broadcast %cst_39 : f32 to vector<16x384xf32>
      %71 = arith.select %69, %70, %53 : vector<16x384xi1>, vector<16x384xf32>
      %72 = arith.select %69, %65, %54 : vector<16x384xi1>, vector<16x384xf32>
      %73 = arith.mulf %68, %65 : vector<16x384xf32>
      %74 = arith.addf %56, %73 : vector<16x384xf32>
      %75 = vector.broadcast %3 : f32 to vector<16x384xf32>
      %76 = arith.mulf %68, %75 : vector<16x384xf32>
      %77 = arith.addf %59, %76 : vector<16x384xf32>
      %cst_40 = arith.constant 3.000000e+00 : f32
      %78 = vector.broadcast %cst_40 : f32 to vector<16x384xf32>
      %79 = arith.mulf %78, %68 : vector<16x384xf32>
      %80 = arith.addf %62, %79 : vector<16x384xf32>
      %c0_41 = arith.constant 0 : index
      %c4_42 = arith.constant 4 : index
      %81 = arith.index_cast %15 : i32 to index
      %c0_43 = arith.constant 0 : index
      %82 = vector.load %arg3[%c0_41, %c4_42, %81, %c0_43] : memref<1x5x128x384xf32, #tpu.memory_space<vmem>>, vector<1x1x16x384xf32>
      %83 = vector.shape_cast %82 : vector<1x1x16x384xf32> to vector<16x384xf32>
      %c0_44 = arith.constant 0 : index
      %c4_45 = arith.constant 4 : index
      %84 = arith.index_cast %15 : i32 to index
      %c0_46 = arith.constant 0 : index
      %85 = vector.load %arg4[%c0_44, %c4_45, %84, %c0_46] : memref<1x5x128x384xf32, #tpu.memory_space<vmem>>, vector<1x1x16x384xf32>
      %86 = vector.shape_cast %85 : vector<1x1x16x384xf32> to vector<16x384xf32>
      %87 = arith.cmpf ogt, %83, %72 : vector<16x384xf32>
      %cst_47 = arith.constant 4.000000e+00 : f32
      %88 = vector.broadcast %cst_47 : f32 to vector<16x384xf32>
      %89 = arith.select %87, %88, %71 : vector<16x384xi1>, vector<16x384xf32>
      %90 = arith.mulf %86, %83 : vector<16x384xf32>
      %91 = arith.addf %74, %90 : vector<16x384xf32>
      %92 = vector.broadcast %4 : f32 to vector<16x384xf32>
      %93 = arith.mulf %86, %92 : vector<16x384xf32>
      %94 = arith.addf %77, %93 : vector<16x384xf32>
      %cst_48 = arith.constant 4.000000e+00 : f32
      %95 = vector.broadcast %cst_48 : f32 to vector<16x384xf32>
      %96 = arith.mulf %95, %86 : vector<16x384xf32>
      %97 = arith.addf %80, %96 : vector<16x384xf32>
      %cst_49 = arith.constant 1.000000e+00 : f32
      %98 = vector.broadcast %cst_49 : f32 to vector<16x384xf32>
      %99 = arith.cmpf oeq, %89, %98 : vector<16x384xf32>
      %100 = vector.broadcast %5 : f32 to vector<16x384xf32>
      %101 = vector.broadcast %8 : f32 to vector<16x384xf32>
      %102 = arith.select %99, %100, %101 : vector<16x384xi1>, vector<16x384xf32>
      %cst_50 = arith.constant 2.000000e+00 : f32
      %103 = vector.broadcast %cst_50 : f32 to vector<16x384xf32>
      %104 = arith.cmpf oeq, %89, %103 : vector<16x384xf32>
      %105 = vector.broadcast %6 : f32 to vector<16x384xf32>
      %106 = arith.select %104, %105, %102 : vector<16x384xi1>, vector<16x384xf32>
      %cst_51 = arith.constant 3.000000e+00 : f32
      %107 = vector.broadcast %cst_51 : f32 to vector<16x384xf32>
      %108 = arith.cmpf oeq, %89, %107 : vector<16x384xf32>
      %109 = vector.broadcast %7 : f32 to vector<16x384xf32>
      %110 = arith.select %108, %109, %106 : vector<16x384xi1>, vector<16x384xf32>
      %111 = arith.cmpf one, %89, %97 : vector<16x384xf32>
      %cst_52 = arith.constant 0.000000e+00 : f32
      %112 = vector.broadcast %cst_52 : f32 to vector<16x384xf32>
      %113 = arith.cmpf one, %89, %112 : vector<16x384xf32>
      %114 = arith.andi %111, %113 : vector<16x384xi1>
      %115 = arith.select %114, %110, %94 : vector<16x384xi1>, vector<16x384xf32>
      %cst_53 = arith.constant 9.99999993E-9 : f32
      %116 = vector.broadcast %cst_53 : f32 to vector<16x384xf32>
      %117 = arith.addf %91, %116 : vector<16x384xf32>
      %118 = math.log %117 : vector<16x384xf32>
      %cst_54 = arith.constant 0.000000e+00 : f32
      %119 = vector.broadcast %cst_54 : f32 to vector<16x384xf32>
      %120 = arith.subf %119, %118 : vector<16x384xf32>
      %121 = arith.mulf %115, %120 : vector<16x384xf32>
      %c0_55 = arith.constant 0 : index
      %c0_56 = arith.constant 0 : index
      %122 = vector.load %arg5[%c0_55, %c0_56] : memref<8x384xf32, #tpu.memory_space<vmem>>, vector<8x384xf32>
      %123 = vector.extract_strided_slice %121 {offsets = [0, 0], sizes = [8, 384], strides = [1, 1]} : vector<16x384xf32> to vector<8x384xf32>
      %124 = vector.extract_strided_slice %121 {offsets = [8, 0], sizes = [8, 384], strides = [1, 1]} : vector<16x384xf32> to vector<8x384xf32>
      %125 = arith.addf %123, %124 : vector<8x384xf32>
      %126 = arith.addf %122, %125 : vector<8x384xf32>
      %c0_57 = arith.constant 0 : index
      %c0_58 = arith.constant 0 : index
      %127 = vector.load %arg5[%c0_57, %c0_58] : memref<8x384xf32, #tpu.memory_space<vmem>>, vector<8x384xf32>
      tpu.vector_store %arg5[%c0_57, %c0_58], %126 {strides = array<i32>} : memref<8x384xf32, #tpu.memory_space<vmem>>, vector<8x384xf32>,
    }
    %c8_i32_6 = arith.constant 8 : i32
    return
  }
  func.func @transform_0(%arg0: i32, %arg1: memref<5xf32, #tpu.memory_space<smem>>, %arg2: memref<5xf32, #tpu.memory_space<smem>>) -> (i32, i32, i32, i32) {
    %c0_i32 = arith.constant 0 : i32
    %c0_i32_0 = arith.constant 0 : i32
    %c0_i32_1 = arith.constant 0 : i32
    %c0_i32_2 = arith.constant 0 : i32
    return %c0_i32, %c0_i32_0, %arg0, %c0_i32_1 : i32, i32, i32, i32
  }
  func.func @transform_1(%arg0: i32, %arg1: memref<5xf32, #tpu.memory_space<smem>>, %arg2: memref<5xf32, #tpu.memory_space<smem>>) -> (i32, i32, i32, i32) {
    %c0_i32 = arith.constant 0 : i32
    %c0_i32_0 = arith.constant 0 : i32
    %c0_i32_1 = arith.constant 0 : i32
    %c0_i32_2 = arith.constant 0 : i32
    return %c0_i32, %c0_i32_0, %arg0, %c0_i32_1 : i32, i32, i32, i32
  }
  func.func @transform_2(%arg0: i32, %arg1: memref<5xf32, #tpu.memory_space<smem>>, %arg2: memref<5xf32, #tpu.memory_space<smem>>) -> (i32, i32) {
    %c0_i32 = arith.constant 0 : i32
    %c0_i32_0 = arith.constant 0 : i32
    return %arg0, %c0_i32 : i32, i32
  }
}

</mosaic_0001>

<llo_original>
// kernel: weighted_cross_entropy_loss.1
$region0: #{weighted_cross_entropy_loss.1}
  #allocation0 [shape = 'u32[]', space=smem, size = 0x4, offset = 0x4, fixed_abs, tag = 'smem constant byte address 0x4 - core index']
  #allocation1 [shape = 'u32[144,128]{1,0:T(1,128)}', space=vmem, size = 0x12000, scoped, tag = 'internal scratch']
  #allocation2 [shape = 's32[1]{0}', space=sflag, size = 0x4, scoped, tag = 'scoped memory for weighted_cross_entropy_loss.1']
  #allocation3 [shape = 'u8[512]{0}', space=smem, size = 0x200, scoped, tag = 'prefetched SMEM operand 0']
  #allocation4 [shape = 'u8[512]{0}', space=smem, size = 0x200, scoped, tag = 'prefetched SMEM operand 1']
  #allocation9 [shape = 's32[]', space=sflag, size = 0x4, offset = 0, fixed_abs, tag = 'sflag constant byte address 0x0 - dummy sync flag']
  #allocation11 [shape = 's32[]', space=sflag, size = 0x4, offset = 0, fixed_abs, tag = 'sflag constant byte address 0x0 - dummy sync flag']
  %s0 = inlined_call_operand.hbm [shape: f32[5], index: 0, kind: input, shape index: {}]
  %s1 = inlined_call_operand.hbm [shape: f32[5], index: 1, kind: input, shape index: {}]
  %s2 = inlined_call_operand.hbm [shape: f32[1,5,256,384], index: 2, kind: input, shape index: {}]
  %s3 = inlined_call_operand.hbm [shape: f32[1,5,256,384], index: 3, kind: input, shape index: {}]
  %s4 = inlined_call_operand.vmem [shape: f32[16,384], index: 4, kind: output, shape index: {}]
  %s5 = sld [smem:[#allocation0]]
  $region56: #{weighted_cross_entropy_loss.1} parent=0
    _
  %s7 = ssub.s32 1, %s5
  %s8 = scalar_select 0, %s7, %s5
  %10 = dma.hbm_to_smem %s0, 16, [#allocation3], [#allocation2]
  %12 = dma.hbm_to_smem %s1, 16, [#allocation4], [#allocation2]
  %13 = dma.done [#allocation2], 32
  %14 = sfence
  $region1: #{weighted_cross_entropy_loss.1} parent=0
    #allocation5 [shape = 'u8[1966080]{0}', space=vmem, size = 0x1e0000, scoped, tag = 'input window, operand 2']
    #allocation6 [shape = 's32[2]{0}', space=sflag, size = 0x8, scoped, tag = 'scoped memory for weighted_cross_entropy_loss.1']
    #allocation7 [shape = 'u8[1966080]{0}', space=vmem, size = 0x1e0000, scoped, tag = 'input window, operand 3']
    #allocation8 [shape = 's32[2]{0}', space=sflag, size = 0x8, scoped, tag = 'scoped memory for weighted_cross_entropy_loss.1']
    %15 = vsyncpa [#allocation6], 0
    %s16 = scalar_lea.sflag [#allocation6], 1
    %17 = vsyncpa %s16, 0
    %18 = vsyncpa [#allocation8], 0
    %s19 = scalar_lea.sflag [#allocation8], 1
    %20 = vsyncpa %s19, 0
    loop: start=0, step=1, limit=4
    $region2: #{weighted_cross_entropy_loss.1} parent=1 // loop_pre_header
      _
    $region3: #{weighted_cross_entropy_loss.1} parent=1 // loop_header
      %s22 = sphi 0, %s26
      %p23 = scmp.ge.s32.totalorder %s22, 4
      %s32 = sphi 0, %s34
      %s35 = sphi 0, %s32
      %s36 = sphi 0, %s35
      %s52 = sphi 0, %s36
      %s58 = sphi 0, %s60
      %s61 = sphi 0, %s58
      %s62 = sphi 0, %s61
      %s78 = sphi 0, %s62
      %s84 = sphi 0, %s86
      %s87 = sphi 0, %s84
      %s88 = sphi 0, %s87
      %s104 = sphi 0, %s88
    $region4: #{weighted_cross_entropy_loss.1} parent=1 // loop_header_branch
      %25 = sbr.rel (%p23) target = $region8
    $region5: #{weighted_cross_entropy_loss.1} parent=1 // loop_body
      %s27 = ssub.s32 %s22, 1
      %s28 = ssub.s32 %s22, 2
      %s29 = sadd.s32 %s22, 1
      %s30 = ssub.s32 %s22, %s29
      %p31 = scmp.eq.s32.totalorder %s30, 0
      %s33 = sadd.s32 %s32, 1
      %s34 = scalar_select %p31, %s32, %s33
      %p37 = pneg %p31
      %p38 = scmp.eq.s32.totalorder %s22, 1
      %p39 = por %p37, %p38
      %p40 = scmp.ne.s32.totalorder %s32, %s35
      %p41 = scmp.eq.s32.totalorder %s22, 0
      %p42 = por %p40, %p41
      %p43 = scmp.ne.s32.totalorder %s32, %s35
      %p44 = scmp.eq.s32.totalorder %s27, 1
      %p45 = por %p43, %p44
      %p46 = scmp.ne.s32.totalorder %s35, %s36
      %p47 = scmp.eq.s32.totalorder %s27, 0
      %p48 = por %p46, %p47
      %p49 = scmp.ne.s32.totalorder %s35, %s36
      %p50 = scmp.eq.s32.totalorder %s28, 1
      %p51 = por %p49, %p50
      %p53 = scmp.ne.s32.totalorder %s36, %s52
      %p54 = scmp.eq.s32.totalorder %s28, 0
      %p55 = por %p53, %p54
      %s56 = ssub.s32 %s22, %s29
      %p57 = scmp.eq.s32.totalorder %s56, 0
      %s59 = sadd.s32 %s58, 1
      %s60 = scalar_select %p57, %s58, %s59
      %p63 = pneg %p57
      %p64 = scmp.eq.s32.totalorder %s22, 1
      %p65 = por %p63, %p64
      %p66 = scmp.ne.s32.totalorder %s58, %s61
      %p67 = scmp.eq.s32.totalorder %s22, 0
      %p68 = por %p66, %p67
      %p69 = scmp.ne.s32.totalorder %s58, %s61
      %p70 = scmp.eq.s32.totalorder %s27, 1
      %p71 = por %p69, %p70
      %p72 = scmp.ne.s32.totalorder %s61, %s62
      %p73 = scmp.eq.s32.totalorder %s27, 0
      %p74 = por %p72, %p73
      %p75 = scmp.ne.s32.totalorder %s61, %s62
      %p76 = scmp.eq.s32.totalorder %s28, 1
      %p77 = por %p75, %p76
      %p79 = scmp.ne.s32.totalorder %s62, %s78
      %p80 = scmp.eq.s32.totalorder %s28, 0
      %p81 = por %p79, %p80
      %s82 = ssub.s32 %s22, %s29
      %p83 = scmp.eq.s32.totalorder %s82, 0
      %s85 = sadd.s32 %s84, 1
      %s86 = scalar_select %p83, %s84, %s85
      %p89 = pneg %p83
      %p90 = scmp.eq.s32.totalorder %s22, 1
      %p91 = por %p89, %p90
      %p92 = scmp.ne.s32.totalorder %s84, %s87
      %p93 = scmp.eq.s32.totalorder %s22, 0
      %p94 = por %p92, %p93
      %p95 = scmp.ne.s32.totalorder %s84, %s87
      %p96 = scmp.eq.s32.totalorder %s27, 1
      %p97 = por %p95, %p96
      %p98 = scmp.ne.s32.totalorder %s87, %s88
      %p99 = scmp.eq.s32.totalorder %s27, 0
      %p100 = por %p98, %p99
      %p101 = scmp.ne.s32.totalorder %s87, %s88
      %p102 = scmp.eq.s32.totalorder %s28, 1
      %p103 = por %p101, %p102
      %p105 = scmp.ne.s32.totalorder %s88, %s104
      %p106 = scmp.eq.s32.totalorder %s28, 0
      %p107 = por %p105, %p106
      %p108 = scmp.le.s32.totalorder 1, %s22
      %p109 = scmp.lt.s32.totalorder %s22, 3
      %p110 = pnand %p108, %p109
      %p111 = pneg %p110
      // Predicated region
      $region9: #{weighted_cross_entropy_loss.1} parent=5 // pred_check
        _
      $region10: #{weighted_cross_entropy_loss.1} parent=5 // pred_check_branch
        %113 = sbr.rel (%p110) target = $region12
      $region11: #{weighted_cross_entropy_loss.1} parent=5 // pred_region
        %s114 = ssub.s32 %s22, 1
      $region12: #{weighted_cross_entropy_loss.1} parent=5 // pred_fallthru
        _
      %p115 = scmp.lt.s32.totalorder %s22, 2
      // Predicated region
      $region13: #{weighted_cross_entropy_loss.1} parent=5 // pred_check
        %p116 = pneg %p115
      $region14: #{weighted_cross_entropy_loss.1} parent=5 // pred_check_branch
        %118 = sbr.rel (%p116) target = $region16
      $region15: #{weighted_cross_entropy_loss.1} parent=5 // pred_region
        // Predicated region
        $region17: #{weighted_cross_entropy_loss.1} parent=15 // pred_check
          %p119 = pneg %p42
        $region18: #{weighted_cross_entropy_loss.1} parent=15 // pred_check_branch
          %121 = sbr.rel (%p119) target = $region20
        $region19: #{weighted_cross_entropy_loss.1} parent=15 // pred_region
          #allocation10 [shape = 'u32[6]{0}', space=smem, size = 0x18, scoped, tag = 'DMA stride descriptor']
          %s122 = sand.u32 %s32, 1
          %s123 = scalar_lea.sflag [#allocation6], %s122
          %s124 = sand.u32 %s32, 1
          %s125 = smul.addr %s124, 1920
          %s126 = scalar_lea.vmem [#allocation5], %s125
          %s127 = smul.u32 16, %s22
          %s129 = ssub.s32 30720, 30720
          %130 = vsyncadd %s123, %s129
          %s131 = smul.addr %s127, 3
          %s132 = smul.addr %s131, 128
          %s133 = scalar_lea.hbm %s2, %s132
          %s135 = sshll.u32 1, 14
          %s136 = sxor.u32 4294967295, %s135
          %s138 = sld [smem:[#allocation0]]
          %s139 = sadd.s32 2, %s138
          %s141 = sshll.u32 7, 26
          %s142 = sxor.u32 4294967295, %s141
          %s143 = sand.u32 0, %s142
          %s144 = sshll.u32 %s139, 26
          %s145 = sor.u32 %s143, %s144
          %s146 = sshll.u32 %s126, 4
          %s147 = int_to_ptr.vmem [resolvable:$true] %s146
          %153 = sst [smem:[#allocation10]] 12288
          %s154 = scalar_lea.smem [#allocation10], 1
          %155 = sst [smem:[%s154]] 6144
          %s156 = scalar_lea.smem [#allocation10], 2
          %157 = sst [smem:[%s156]] 16
          %s158 = scalar_lea.smem [#allocation10], 3
          %159 = sst [smem:[%s158]] 384
          %s160 = scalar_lea.smem [#allocation10], 4
          %161 = sst [smem:[%s160]] 384
          %s162 = scalar_lea.smem [#allocation10], 5
          %163 = sst [smem:[%s162]] 24
          %165 = dma.general %s133, 30720, %s147, %s123, [#allocation9], [#allocation10], %s145, 0
        $region20: #{weighted_cross_entropy_loss.1} parent=15 // pred_fallthru
          _
        // Predicated region
        $region21: #{weighted_cross_entropy_loss.1} parent=15 // pred_check
          %p166 = pneg %p68
        $region22: #{weighted_cross_entropy_loss.1} parent=15 // pred_check_branch
          %168 = sbr.rel (%p166) target = $region24
        $region23: #{weighted_cross_entropy_loss.1} parent=15 // pred_region
          #allocation12 [shape = 'u32[6]{0}', space=smem, size = 0x18, scoped, tag = 'DMA stride descriptor']
          %s169 = sand.u32 %s58, 1
          %s170 = scalar_lea.sflag [#allocation8], %s169
          %s171 = sand.u32 %s58, 1
          %s172 = smul.addr %s171, 1920
          %s173 = scalar_lea.vmem [#allocation7], %s172
          %s174 = smul.u32 16, %s22
          %s176 = ssub.s32 30720, 30720
          %177 = vsyncadd %s170, %s176
          %s178 = smul.addr %s174, 3
          %s179 = smul.addr %s178, 128
          %s180 = scalar_lea.hbm %s3, %s179
          %s182 = sshll.u32 1, 14
          %s183 = sxor.u32 4294967295, %s182
          %s185 = sld [smem:[#allocation0]]
          %s186 = sadd.s32 2, %s185
          %s188 = sshll.u32 7, 26
          %s189 = sxor.u32 4294967295, %s188
          %s190 = sand.u32 0, %s189
          %s191 = sshll.u32 %s186, 26
          %s192 = sor.u32 %s190, %s191
          %s193 = sshll.u32 %s173, 4
          %s194 = int_to_ptr.vmem [resolvable:$true] %s193
          %200 = sst [smem:[#allocation12]] 12288
          %s201 = scalar_lea.smem [#allocation12], 1
          %202 = sst [smem:[%s201]] 6144
          %s203 = scalar_lea.smem [#allocation12], 2
          %204 = sst [smem:[%s203]] 16
          %s205 = scalar_lea.smem [#allocation12], 3
          %206 = sst [smem:[%s205]] 384
          %s207 = scalar_lea.smem [#allocation12], 4
          %208 = sst [smem:[%s207]] 384
          %s209 = scalar_lea.smem [#allocation12], 5
          %210 = sst [smem:[%s209]] 24
          %212 = dma.general %s180, 30720, %s194, %s170, [#allocation11], [#allocation12], %s192, 0
        $region24: #{weighted_cross_entropy_loss.1} parent=15 // pred_fallthru
          _
      $region16: #{weighted_cross_entropy_loss.1} parent=5 // pred_fallthru
        _
      %p213 = scmp.le.s32.totalorder 1, %s22
      %p214 = scmp.lt.s32.totalorder %s22, 3
      %p215 = pnand %p213, %p214
      %p216 = pneg %p215
      // Predicated region
      $region25: #{weighted_cross_entropy_loss.1} parent=5 // pred_check
        _
      $region26: #{weighted_cross_entropy_loss.1} parent=5 // pred_check_branch
        %218 = sbr.rel (%p215) target = $region28
      $region27: #{weighted_cross_entropy_loss.1} parent=5 // pred_region
        %s219 = ssub.s32 %s22, 1
        %s220 = sand.u32 %s35, 1
        %s221 = scalar_lea.sflag [#allocation6], %s220
        %s222 = sand.u32 %s35, 1
        %s223 = smul.addr %s222, 1920
        %s224 = scalar_lea.vmem [#allocation5], %s223
        // Predicated region
        $region29: #{weighted_cross_entropy_loss.1} parent=27 // pred_check
          %p225 = pneg %p48
        $region30: #{weighted_cross_entropy_loss.1} parent=27 // pred_check_branch
          %227 = sbr.rel (%p225) target = $region32
        $region31: #{weighted_cross_entropy_loss.1} parent=27 // pred_region
          %228 = dma.done %s221, 30720
        $region32: #{weighted_cross_entropy_loss.1} parent=27 // pred_fallthru
          _
        %s229 = sand.u32 %s61, 1
        %s230 = scalar_lea.sflag [#allocation8], %s229
        %s231 = sand.u32 %s61, 1
        %s232 = smul.addr %s231, 1920
        %s233 = scalar_lea.vmem [#allocation7], %s232
        // Predicated region
        $region33: #{weighted_cross_entropy_loss.1} parent=27 // pred_check
          %p234 = pneg %p74
        $region34: #{weighted_cross_entropy_loss.1} parent=27 // pred_check_branch
          %236 = sbr.rel (%p234) target = $region36
        $region35: #{weighted_cross_entropy_loss.1} parent=27 // pred_region
          %237 = dma.done %s230, 30720
        $region36: #{weighted_cross_entropy_loss.1} parent=27 // pred_fallthru
          _
        %s238 = sand.u32 %s35, 1
        %s239 = scalar_lea.sflag [#allocation6], %s238
        %s240 = sand.u32 %s35, 1
        %s241 = smul.addr %s240, 1920
        %s242 = scalar_lea.vmem [#allocation5], %s241
        %p243 = pneg %p48
        %p244 = pneg %p45
        %s245 = sand.u32 %s61, 1
        %s246 = scalar_lea.sflag [#allocation8], %s245
        %s247 = sand.u32 %s61, 1
        %s248 = smul.addr %s247, 1920
        %s249 = scalar_lea.vmem [#allocation7], %s248
        %p250 = pneg %p74
        %p251 = pneg %p71
        %p252 = pneg %p100
        %p253 = pneg %p97
        %p254 = scmp.lt.s32.totalorder %s27, 1
        %s255 = scalar_select %p254, %s27, 1
        %s256 = smul.addr %s255, 3
        %s257 = smul.addr %s256, 8
        %s258 = scalar_lea.vmem %s4, %s257
        %s259 = smul.u32 16, %s27
        %s260 = smul.u32 16, %s27
        %p261 = scmp.lt.s32.totalorder %s27, 1
        %s262 = scalar_select %p261, %s27, 1
        %s263 = smul.addr %s262, 3
        %s264 = smul.addr %s263, 8
        %s265 = scalar_lea.vmem %s4, %s264
        %s266 = sld [smem:[#allocation3]]
        %s267 = sld [smem:[#allocation3 + $0x1]]
        %s268 = sld [smem:[#allocation3 + $0x2]]
        %s269 = sld [smem:[#allocation3 + $0x3]]
        %s270 = sld [smem:[#allocation3 + $0x4]]
        %s271 = sld [smem:[#allocation4 + $0x1]]
        %s272 = sld [smem:[#allocation4 + $0x2]]
        %s273 = sld [smem:[#allocation4 + $0x3]]
        %s274 = sld [smem:[#allocation4 + $0x4]]
        %275 = vst [vmem:[%s265] sm:$0xff] 0.0
        %276 = vst [vmem:[%s265 + $0x8] sm:$0xff] 0.0
        %277 = vst [vmem:[%s265 + $0x10] sm:$0xff] 0.0
        loop: start=0, step=1, limit=8
        $region37: #{weighted_cross_entropy_loss.1} parent=27 // loop_pre_header
          _
        $region38: #{weighted_cross_entropy_loss.1} parent=27 // loop_header
          %s279 = sphi 0, %s283
          %p280 = scmp.ge.s32.totalorder %s279, 8
        $region39: #{weighted_cross_entropy_loss.1} parent=27 // loop_header_branch
          %282 = sbr.rel (%p280) target = $region43
        $region40: #{weighted_cross_entropy_loss.1} parent=27 // loop_body
          %s284 = smul.u32 %s279, 16
          %s285 = sshra.s32 %s284, 3
          %s286 = sand.u32 %s284, 7
          %s287 = smul.u32 %s285, 3
          %s288 = smul.addr %s287, 8
          %s289 = scalar_lea.vmem %s224, %s288 [#allocation5]
          %v290 = vld [vmem:[%s289] sm:$0xff]
          %v291 = vld [vmem:[%s289 + $0x8] sm:$0xff]
          %v292 = vld [vmem:[%s289 + $0x10] sm:$0xff]
          %v293 = vld [vmem:[%s289 + $0x18] sm:$0xff]
          %v294 = vld [vmem:[%s289 + $0x20] sm:$0xff]
          %v295 = vld [vmem:[%s289 + $0x28] sm:$0xff]
          %s296 = smul.addr %s287, 8
          %s297 = scalar_lea.vmem %s233, %s296 [#allocation7]
          %v298 = vld [vmem:[%s297] sm:$0xff]
          %v299 = vld [vmem:[%s297 + $0x8] sm:$0xff]
          %v300 = vld [vmem:[%s297 + $0x10] sm:$0xff]
          %v301 = vld [vmem:[%s297 + $0x18] sm:$0xff]
          %v302 = vld [vmem:[%s297 + $0x20] sm:$0xff]
          %v303 = vld [vmem:[%s297 + $0x28] sm:$0xff]
          %v304 = vmul.f32 %v298, %v290
          %v305 = vmul.f32 %v299, %v291
          %v306 = vmul.f32 %v300, %v292
          %v307 = vmul.f32 %v301, %v293
          %v308 = vmul.f32 %v302, %v294
          %v309 = vmul.f32 %v303, %v295
          %v310 = vstv %s266
          %v311 = vmul.f32 %v298, %v310
          %v312 = vmul.f32 %v299, %v310
          %v313 = vmul.f32 %v300, %v310
          %v314 = vmul.f32 %v301, %v310
          %v315 = vmul.f32 %v302, %v310
          %v316 = vmul.f32 %v303, %v310
          %s317 = sadd.s32 %s287, 48
          %s318 = smul.addr %s317, 8
          %s319 = scalar_lea.vmem %s224, %s318 [#allocation5]
          %v320 = vld [vmem:[%s319] sm:$0xff]
          %v321 = vld [vmem:[%s319 + $0x8] sm:$0xff]
          %v322 = vld [vmem:[%s319 + $0x10] sm:$0xff]
          %v323 = vld [vmem:[%s319 + $0x18] sm:$0xff]
          %v324 = vld [vmem:[%s319 + $0x20] sm:$0xff]
          %v325 = vld [vmem:[%s319 + $0x28] sm:$0xff]
          %s326 = smul.addr %s317, 8
          %s327 = scalar_lea.vmem %s233, %s326 [#allocation7]
          %v328 = vld [vmem:[%s327] sm:$0xff]
          %v329 = vld [vmem:[%s327 + $0x8] sm:$0xff]
          %v330 = vld [vmem:[%s327 + $0x10] sm:$0xff]
          %v331 = vld [vmem:[%s327 + $0x18] sm:$0xff]
          %v332 = vld [vmem:[%s327 + $0x20] sm:$0xff]
          %v333 = vld [vmem:[%s327 + $0x28] sm:$0xff]
          %vm334 = vcmp.gt.f32.partialorder %v320, %v290
          %vm335 = vcmp.gt.f32.partialorder %v321, %v291
          %vm336 = vcmp.gt.f32.partialorder %v322, %v292
          %vm337 = vcmp.gt.f32.partialorder %v323, %v293
          %vm338 = vcmp.gt.f32.partialorder %v324, %v294
          %vm339 = vcmp.gt.f32.partialorder %v325, %v295
          %v340 = vsel %vm334, 1.0, 0.0
          %v341 = vsel %vm335, 1.0, 0.0
          %v342 = vsel %vm336, 1.0, 0.0
          %v343 = vsel %vm337, 1.0, 0.0
          %v344 = vsel %vm338, 1.0, 0.0
          %v345 = vsel %vm339, 1.0, 0.0
          %v346 = vsel %vm334, %v320, %v290
          %v347 = vsel %vm335, %v321, %v291
          %v348 = vsel %vm336, %v322, %v292
          %v349 = vsel %vm337, %v323, %v293
          %v350 = vsel %vm338, %v324, %v294
          %v351 = vsel %vm339, %v325, %v295
          %v352 = vmul.f32 %v328, %v320
          %v353 = vmul.f32 %v329, %v321
          %v354 = vmul.f32 %v330, %v322
          %v355 = vmul.f32 %v331, %v323
          %v356 = vmul.f32 %v332, %v324
          %v357 = vmul.f32 %v333, %v325
          %v358 = vadd.f32 %v304, %v352
          %v359 = vadd.f32 %v305, %v353
          %v360 = vadd.f32 %v306, %v354
          %v361 = vadd.f32 %v307, %v355
          %v362 = vadd.f32 %v308, %v356
          %v363 = vadd.f32 %v309, %v357
          %v364 = vstv %s267
          %v365 = vmul.f32 %v328, %v364
          %v366 = vmul.f32 %v329, %v364
          %v367 = vmul.f32 %v330, %v364
          %v368 = vmul.f32 %v331, %v364
          %v369 = vmul.f32 %v332, %v364
          %v370 = vmul.f32 %v333, %v364
          %v371 = vadd.f32 %v311, %v365
          %v372 = vadd.f32 %v312, %v366
          %v373 = vadd.f32 %v313, %v367
          %v374 = vadd.f32 %v314, %v368
          %v375 = vadd.f32 %v315, %v369
          %v376 = vadd.f32 %v316, %v370
          %v377 = vadd.f32 %v328, 0.0
          %v378 = vadd.f32 %v329, 0.0
          %v379 = vadd.f32 %v330, 0.0
          %v380 = vadd.f32 %v331, 0.0
          %v381 = vadd.f32 %v332, 0.0
          %v382 = vadd.f32 %v333, 0.0
          %s383 = sadd.s32 %s287, 96
          %s384 = smul.addr %s383, 8
          %s385 = scalar_lea.vmem %s224, %s384 [#allocation5]
          %v386 = vld [vmem:[%s385] sm:$0xff]
          %v387 = vld [vmem:[%s385 + $0x8] sm:$0xff]
          %v388 = vld [vmem:[%s385 + $0x10] sm:$0xff]
          %v389 = vld [vmem:[%s385 + $0x18] sm:$0xff]
          %v390 = vld [vmem:[%s385 + $0x20] sm:$0xff]
          %v391 = vld [vmem:[%s385 + $0x28] sm:$0xff]
          %s392 = smul.addr %s383, 8
          %s393 = scalar_lea.vmem %s233, %s392 [#allocation7]
          %v394 = vld [vmem:[%s393] sm:$0xff]
          %v395 = vld [vmem:[%s393 + $0x8] sm:$0xff]
          %v396 = vld [vmem:[%s393 + $0x10] sm:$0xff]
          %v397 = vld [vmem:[%s393 + $0x18] sm:$0xff]
          %v398 = vld [vmem:[%s393 + $0x20] sm:$0xff]
          %v399 = vld [vmem:[%s393 + $0x28] sm:$0xff]
          %vm400 = vcmp.gt.f32.partialorder %v386, %v346
          %vm401 = vcmp.gt.f32.partialorder %v387, %v347
          %vm402 = vcmp.gt.f32.partialorder %v388, %v348
          %vm403 = vcmp.gt.f32.partialorder %v389, %v349
          %vm404 = vcmp.gt.f32.partialorder %v390, %v350
          %vm405 = vcmp.gt.f32.partialorder %v391, %v351
          %v406 = vsel %vm400, 2.0, %v340
          %v407 = vsel %vm401, 2.0, %v341
          %v408 = vsel %vm402, 2.0, %v342
          %v409 = vsel %vm403, 2.0, %v343
          %v410 = vsel %vm404, 2.0, %v344
          %v411 = vsel %vm405, 2.0, %v345
          %v412 = vsel %vm400, %v386, %v346
          %v413 = vsel %vm401, %v387, %v347
          %v414 = vsel %vm402, %v388, %v348
          %v415 = vsel %vm403, %v389, %v349
          %v416 = vsel %vm404, %v390, %v350
          %v417 = vsel %vm405, %v391, %v351
          %v418 = vmul.f32 %v394, %v386
          %v419 = vmul.f32 %v395, %v387
          %v420 = vmul.f32 %v396, %v388
          %v421 = vmul.f32 %v397, %v389
          %v422 = vmul.f32 %v398, %v390
          %v423 = vmul.f32 %v399, %v391
          %v424 = vadd.f32 %v358, %v418
          %v425 = vadd.f32 %v359, %v419
          %v426 = vadd.f32 %v360, %v420
          %v427 = vadd.f32 %v361, %v421
          %v428 = vadd.f32 %v362, %v422
          %v429 = vadd.f32 %v363, %v423
          %v430 = vstv %s268
          %v431 = vmul.f32 %v394, %v430
          %v432 = vmul.f32 %v395, %v430
          %v433 = vmul.f32 %v396, %v430
          %v434 = vmul.f32 %v397, %v430
          %v435 = vmul.f32 %v398, %v430
          %v436 = vmul.f32 %v399, %v430
          %v437 = vadd.f32 %v371, %v431
          %v438 = vadd.f32 %v372, %v432
          %v439 = vadd.f32 %v373, %v433
          %v440 = vadd.f32 %v374, %v434
          %v441 = vadd.f32 %v375, %v435
          %v442 = vadd.f32 %v376, %v436
          %v443 = vmul.f32 %v394, 2.0
          %v444 = vmul.f32 %v395, 2.0
          %v445 = vmul.f32 %v396, 2.0
          %v446 = vmul.f32 %v397, 2.0
          %v447 = vmul.f32 %v398, 2.0
          %v448 = vmul.f32 %v399, 2.0
          %v449 = vadd.f32 %v377, %v443
          %v450 = vadd.f32 %v378, %v444
          %v451 = vadd.f32 %v379, %v445
          %v452 = vadd.f32 %v380, %v446
          %v453 = vadd.f32 %v381, %v447
          %v454 = vadd.f32 %v382, %v448
          %s455 = sadd.s32 %s287, 144
          %s456 = smul.addr %s455, 8
          %s457 = scalar_lea.vmem %s224, %s456 [#allocation5]
          %v458 = vld [vmem:[%s457] sm:$0xff]
          %v459 = vld [vmem:[%s457 + $0x8] sm:$0xff]
          %v460 = vld [vmem:[%s457 + $0x10] sm:$0xff]
          %v461 = vld [vmem:[%s457 + $0x18] sm:$0xff]
          %v462 = vld [vmem:[%s457 + $0x20] sm:$0xff]
          %v463 = vld [vmem:[%s457 + $0x28] sm:$0xff]
          %s464 = smul.addr %s455, 8
          %s465 = scalar_lea.vmem %s233, %s464 [#allocation7]
          %v466 = vld [vmem:[%s465] sm:$0xff]
          %v467 = vld [vmem:[%s465 + $0x8] sm:$0xff]
          %v468 = vld [vmem:[%s465 + $0x10] sm:$0xff]
          %v469 = vld [vmem:[%s465 + $0x18] sm:$0xff]
          %v470 = vld [vmem:[%s465 + $0x20] sm:$0xff]
          %v471 = vld [vmem:[%s465 + $0x28] sm:$0xff]
          %vm472 = vcmp.gt.f32.partialorder %v458, %v412
          %vm473 = vcmp.gt.f32.partialorder %v459, %v413
          %vm474 = vcmp.gt.f32.partialorder %v460, %v414
          %vm475 = vcmp.gt.f32.partialorder %v461, %v415
          %vm476 = vcmp.gt.f32.partialorder %v462, %v416
          %vm477 = vcmp.gt.f32.partialorder %v463, %v417
          %v478 = vsel %vm472, 3.0, %v406
          %v479 = vsel %vm473, 3.0, %v407
          %v480 = vsel %vm474, 3.0, %v408
          %v481 = vsel %vm475, 3.0, %v409
          %v482 = vsel %vm476, 3.0, %v410
          %v483 = vsel %vm477, 3.0, %v411
          %v484 = vsel %vm472, %v458, %v412
          %v485 = vsel %vm473, %v459, %v413
          %v486 = vsel %vm474, %v460, %v414
          %v487 = vsel %vm475, %v461, %v415
          %v488 = vsel %vm476, %v462, %v416
          %v489 = vsel %vm477, %v463, %v417
          %v490 = vmul.f32 %v466, %v458
          %v491 = vmul.f32 %v467, %v459
          %v492 = vmul.f32 %v468, %v460
          %v493 = vmul.f32 %v469, %v461
          %v494 = vmul.f32 %v470, %v462
          %v495 = vmul.f32 %v471, %v463
          %v496 = vadd.f32 %v424, %v490
          %v497 = vadd.f32 %v425, %v491
          %v498 = vadd.f32 %v426, %v492
          %v499 = vadd.f32 %v427, %v493
          %v500 = vadd.f32 %v428, %v494
          %v501 = vadd.f32 %v429, %v495
          %v502 = vstv %s269
          %v503 = vmul.f32 %v466, %v502
          %v504 = vmul.f32 %v467, %v502
          %v505 = vmul.f32 %v468, %v502
          %v506 = vmul.f32 %v469, %v502
          %v507 = vmul.f32 %v470, %v502
          %v508 = vmul.f32 %v471, %v502
          %v509 = vadd.f32 %v437, %v503
          %v510 = vadd.f32 %v438, %v504
          %v511 = vadd.f32 %v439, %v505
          %v512 = vadd.f32 %v440, %v506
          %v513 = vadd.f32 %v441, %v507
          %v514 = vadd.f32 %v442, %v508
          %v515 = vmul.f32 %v466, 3.0
          %v516 = vmul.f32 %v467, 3.0
          %v517 = vmul.f32 %v468, 3.0
          %v518 = vmul.f32 %v469, 3.0
          %v519 = vmul.f32 %v470, 3.0
          %v520 = vmul.f32 %v471, 3.0
          %v521 = vadd.f32 %v449, %v515
          %v522 = vadd.f32 %v450, %v516
          %v523 = vadd.f32 %v451, %v517
          %v524 = vadd.f32 %v452, %v518
          %v525 = vadd.f32 %v453, %v519
          %v526 = vadd.f32 %v454, %v520
          %s527 = sadd.s32 %s287, 192
          %s528 = smul.addr %s527, 8
          %s529 = scalar_lea.vmem %s224, %s528 [#allocation5]
          %v530 = vld [vmem:[%s529] sm:$0xff]
          %v531 = vld [vmem:[%s529 + $0x8] sm:$0xff]
          %v532 = vld [vmem:[%s529 + $0x10] sm:$0xff]
          %v533 = vld [vmem:[%s529 + $0x18] sm:$0xff]
          %v534 = vld [vmem:[%s529 + $0x20] sm:$0xff]
          %v535 = vld [vmem:[%s529 + $0x28] sm:$0xff]
          %s536 = smul.addr %s527, 8
          %s537 = scalar_lea.vmem %s233, %s536 [#allocation7]
          %v538 = vld [vmem:[%s537] sm:$0xff]
          %v539 = vld [vmem:[%s537 + $0x8] sm:$0xff]
          %v540 = vld [vmem:[%s537 + $0x10] sm:$0xff]
          %v541 = vld [vmem:[%s537 + $0x18] sm:$0xff]
          %v542 = vld [vmem:[%s537 + $0x20] sm:$0xff]
          %v543 = vld [vmem:[%s537 + $0x28] sm:$0xff]
          %vm544 = vcmp.gt.f32.partialorder %v530, %v484
          %vm545 = vcmp.gt.f32.partialorder %v531, %v485
          %vm546 = vcmp.gt.f32.partialorder %v532, %v486
          %vm547 = vcmp.gt.f32.partialorder %v533, %v487
          %vm548 = vcmp.gt.f32.partialorder %v534, %v488
          %vm549 = vcmp.gt.f32.partialorder %v535, %v489
          %v550 = vsel %vm544, 4.0, %v478
          %v551 = vsel %vm545, 4.0, %v479
          %v552 = vsel %vm546, 4.0, %v480
          %v553 = vsel %vm547, 4.0, %v481
          %v554 = vsel %vm548, 4.0, %v482
          %v555 = vsel %vm549, 4.0, %v483
          %v556 = vmul.f32 %v538, %v530
          %v557 = vmul.f32 %v539, %v531
          %v558 = vmul.f32 %v540, %v532
          %v559 = vmul.f32 %v541, %v533
          %v560 = vmul.f32 %v542, %v534
          %v561 = vmul.f32 %v543, %v535
          %v562 = vadd.f32 %v496, %v556
          %v563 = vadd.f32 %v497, %v557
          %v564 = vadd.f32 %v498, %v558
          %v565 = vadd.f32 %v499, %v559
          %v566 = vadd.f32 %v500, %v560
          %v567 = vadd.f32 %v501, %v561
          %v568 = vstv %s270
          %v569 = vmul.f32 %v538, %v568
          %v570 = vmul.f32 %v539, %v568
          %v571 = vmul.f32 %v540, %v568
          %v572 = vmul.f32 %v541, %v568
          %v573 = vmul.f32 %v542, %v568
          %v574 = vmul.f32 %v543, %v568
          %v575 = vadd.f32 %v509, %v569
          %v576 = vadd.f32 %v510, %v570
          %v577 = vadd.f32 %v511, %v571
          %v578 = vadd.f32 %v512, %v572
          %v579 = vadd.f32 %v513, %v573
          %v580 = vadd.f32 %v514, %v574
          %v581 = vmul.f32 %v538, 4.0
          %v582 = vmul.f32 %v539, 4.0
          %v583 = vmul.f32 %v540, 4.0
          %v584 = vmul.f32 %v541, 4.0
          %v585 = vmul.f32 %v542, 4.0
          %v586 = vmul.f32 %v543, 4.0
          %v587 = vadd.f32 %v521, %v581
          %v588 = vadd.f32 %v522, %v582
          %v589 = vadd.f32 %v523, %v583
          %v590 = vadd.f32 %v524, %v584
          %v591 = vadd.f32 %v525, %v585
          %v592 = vadd.f32 %v526, %v586
          %vm593 = vcmp.eq.f32.partialorder %v550, 1.0
          %vm594 = vcmp.eq.f32.partialorder %v551, 1.0
          %vm595 = vcmp.eq.f32.partialorder %v552, 1.0
          %vm596 = vcmp.eq.f32.partialorder %v553, 1.0
          %vm597 = vcmp.eq.f32.partialorder %v554, 1.0
          %vm598 = vcmp.eq.f32.partialorder %v555, 1.0
          %v599 = vstv %s271
          %v600 = vstv %s274
          %v601 = vsel %vm593, %v599, %v600
          %v602 = vsel %vm594, %v599, %v600
          %v603 = vsel %vm595, %v599, %v600
          %v604 = vsel %vm596, %v599, %v600
          %v605 = vsel %vm597, %v599, %v600
          %v606 = vsel %vm598, %v599, %v600
          %vm607 = vcmp.eq.f32.partialorder %v550, 2.0
          %vm608 = vcmp.eq.f32.partialorder %v551, 2.0
          %vm609 = vcmp.eq.f32.partialorder %v552, 2.0
          %vm610 = vcmp.eq.f32.partialorder %v553, 2.0
          %vm611 = vcmp.eq.f32.partialorder %v554, 2.0
          %vm612 = vcmp.eq.f32.partialorder %v555, 2.0
          %v613 = vstv %s272
          %v614 = vsel %vm607, %v613, %v601
          %v615 = vsel %vm608, %v613, %v602
          %v616 = vsel %vm609, %v613, %v603
          %v617 = vsel %vm610, %v613, %v604
          %v618 = vsel %vm611, %v613, %v605
          %v619 = vsel %vm612, %v613, %v606
          %vm620 = vcmp.eq.f32.partialorder %v550, 3.0
          %vm621 = vcmp.eq.f32.partialorder %v551, 3.0
          %vm622 = vcmp.eq.f32.partialorder %v552, 3.0
          %vm623 = vcmp.eq.f32.partialorder %v553, 3.0
          %vm624 = vcmp.eq.f32.partialorder %v554, 3.0
          %vm625 = vcmp.eq.f32.partialorder %v555, 3.0
          %v626 = vstv %s273
          %v627 = vsel %vm620, %v626, %v614
          %v628 = vsel %vm621, %v626, %v615
          %v629 = vsel %vm622, %v626, %v616
          %v630 = vsel %vm623, %v626, %v617
          %v631 = vsel %vm624, %v626, %v618
          %v632 = vsel %vm625, %v626, %v619
          %vm633 = vcmp.ne.f32.partialorder %v550, %v587
          %vm634 = vcmp.ne.f32.partialorder %v551, %v588
          %vm635 = vcmp.ne.f32.partialorder %v552, %v589
          %vm636 = vcmp.ne.f32.partialorder %v553, %v590
          %vm637 = vcmp.ne.f32.partialorder %v554, %v591
          %vm638 = vcmp.ne.f32.partialorder %v555, %v592
          %vm639 = vcmp.ne.f32.partialorder %v550, 0.0
          %vm640 = vcmp.ne.f32.partialorder %v551, 0.0
          %vm641 = vcmp.ne.f32.partialorder %v552, 0.0
          %vm642 = vcmp.ne.f32.partialorder %v553, 0.0
          %vm643 = vcmp.ne.f32.partialorder %v554, 0.0
          %vm644 = vcmp.ne.f32.partialorder %v555, 0.0
          %vm645 = vmand %vm633, %vm639
          %vm646 = vmand %vm634, %vm640
          %vm647 = vmand %vm635, %vm641
          %vm648 = vmand %vm636, %vm642
          %vm649 = vmand %vm637, %vm643
          %vm650 = vmand %vm638, %vm644
          %v651 = vsel %vm645, %v627, %v575
          %v652 = vsel %vm646, %v628, %v576
          %v653 = vsel %vm647, %v629, %v577
          %v654 = vsel %vm648, %v630, %v578
          %v655 = vsel %vm649, %v631, %v579
          %v656 = vsel %vm650, %v632, %v580
          %v657 = vadd.f32 %v562, 1e-08
          %v658 = vadd.f32 %v563, 1e-08
          %v659 = vadd.f32 %v564, 1e-08
          %v660 = vadd.f32 %v565, 1e-08
          %v661 = vadd.f32 %v566, 1e-08
          %v662 = vadd.f32 %v567, 1e-08
          %v663 = vlog2.pop %v657
          %v664 = vmul.f32 %v663, 0.6931472
          %v665 = vlog2.pop %v658
          %v666 = vmul.f32 %v665, 0.6931472
          %v667 = vlog2.pop %v659
          %v668 = vmul.f32 %v667, 0.6931472
          %v669 = vlog2.pop %v660
          %v670 = vmul.f32 %v669, 0.6931472
          %v671 = vlog2.pop %v661
          %v672 = vmul.f32 %v671, 0.6931472
          %v673 = vlog2.pop %v662
          %v674 = vmul.f32 %v673, 0.6931472
          %v675 = vsub.f32 0.0, %v664
          %v676 = vsub.f32 0.0, %v666
          %v677 = vsub.f32 0.0, %v668
          %v678 = vsub.f32 0.0, %v670
          %v679 = vsub.f32 0.0, %v672
          %v680 = vsub.f32 0.0, %v674
          %v681 = vmul.f32 %v651, %v675
          %v682 = vmul.f32 %v652, %v676
          %v683 = vmul.f32 %v653, %v677
          %v684 = vmul.f32 %v654, %v678
          %v685 = vmul.f32 %v655, %v679
          %v686 = vmul.f32 %v656, %v680
          %v687 = vld [vmem:[%s265] sm:$0xff]
          %v688 = vld [vmem:[%s265 + $0x8] sm:$0xff]
          %v689 = vld [vmem:[%s265 + $0x10] sm:$0xff]
          %v690 = vadd.f32 %v681, %v684
          %v691 = vadd.f32 %v682, %v685
          %v692 = vadd.f32 %v683, %v686
          %v693 = vadd.f32 %v687, %v690
          %v694 = vadd.f32 %v688, %v691
          %v695 = vadd.f32 %v689, %v692
          %696 = vst [vmem:[%s265] sm:$0xff] %v693
          %697 = vst [vmem:[%s265 + $0x8] sm:$0xff] %v694
          %698 = vst [vmem:[%s265 + $0x10] sm:$0xff] %v695
        $region41: #{weighted_cross_entropy_loss.1} parent=27 // loop_footer
          %s283 = sadd.s32 1, %s279
        $region42: #{weighted_cross_entropy_loss.1} parent=27 // loop_footer_branch
          %278 = sbr.rel target = $region38
        $region43: #{weighted_cross_entropy_loss.1} parent=27 // loop_exit
          _
        %p699 = scmp.lt.s32.totalorder %s27, 1
        %s700 = scalar_select %p699, %s27, 1
        %s701 = smul.addr %s700, 3
        %s702 = smul.addr %s701, 8
        %s703 = scalar_lea.vmem %s4, %s702
        // Predicated region
        $region44: #{weighted_cross_entropy_loss.1} parent=27 // pred_check
          %p704 = pneg %p97
        $region45: #{weighted_cross_entropy_loss.1} parent=27 // pred_check_branch
          %706 = sbr.rel (%p704) target = $region47
        $region46: #{weighted_cross_entropy_loss.1} parent=27 // pred_region
          _
        $region47: #{weighted_cross_entropy_loss.1} parent=27 // pred_fallthru
          _
      $region28: #{weighted_cross_entropy_loss.1} parent=5 // pred_fallthru
        _
      %p707 = scmp.le.s32.totalorder 2, %s22
      // Predicated region
      $region48: #{weighted_cross_entropy_loss.1} parent=5 // pred_check
        %p708 = pneg %p707
      $region49: #{weighted_cross_entropy_loss.1} parent=5 // pred_check_branch
        %710 = sbr.rel (%p708) target = $region51
      $region50: #{weighted_cross_entropy_loss.1} parent=5 // pred_region
        %s711 = ssub.s32 %s22, 2
        // Predicated region
        $region52: #{weighted_cross_entropy_loss.1} parent=50 // pred_check
          %p712 = pneg %p103
        $region53: #{weighted_cross_entropy_loss.1} parent=50 // pred_check_branch
          %714 = sbr.rel (%p712) target = $region55
        $region54: #{weighted_cross_entropy_loss.1} parent=50 // pred_region
          %p715 = scmp.lt.s32.totalorder %s28, 1
          %s716 = scalar_select %p715, %s28, 1
          %s717 = smul.addr %s716, 3
          %s718 = smul.addr %s717, 8
          %s719 = scalar_lea.vmem %s4, %s718
        $region55: #{weighted_cross_entropy_loss.1} parent=50 // pred_fallthru
          _
      $region51: #{weighted_cross_entropy_loss.1} parent=5 // pred_fallthru
        _
    $region6: #{weighted_cross_entropy_loss.1} parent=1 // loop_footer
      %s26 = sadd.s32 1, %s22
    $region7: #{weighted_cross_entropy_loss.1} parent=1 // loop_footer_branch
      %21 = sbr.rel target = $region3
    $region8: #{weighted_cross_entropy_loss.1} parent=1 // loop_exit
      _
    %720 = vsyncpa [#allocation6], 1
    %s721 = scalar_lea.sflag [#allocation6], 1
    %722 = vsyncpa %s721, 1
    %723 = vsyncpa [#allocation8], 1
    %s724 = scalar_lea.sflag [#allocation8], 1
    %725 = vsyncpa %s724, 1

</llo_original>
